<compile_context>
chip_gen: v6e
topology: v6e:2x2x1
jax: 0.10.0
libtpu: 0.0.40
codegen_flags: <defaults>
</compile_context>

<pallas_src>
import functools

import jax
import jax.numpy as jnp
from jax.experimental import pallas as pl
from jax.experimental.pallas import tpu as pltpu


_INPUT_VMEM_BUDGET = 24 * 1024 * 1024   # double-buffered input blocks
_TEMP_VMEM_BUDGET = 6 * 1024 * 1024     # per-sub-chunk f32 temporaries
_SUB_TARGET_ELEMS = 256 * 1024          # aim: >= ~256K elements per inner chunk
_VMEM_LIMIT_CAP = 48 * 1024 * 1024      # stays inside v7x's 64 MiB physical VMEM


def _round_up(v, m):
    return ((v + m - 1) // m) * m


def _vmem_per_row(c, itemsize):
    lanes = _round_up(c, 128)
    # Double-buffered logits block + double-buffered (TN,1) int32 targets
    # (which lane-pad to (TN,128) in VMEM -- budgeted, see TODO above).
    in_per_row = 2 * lanes * itemsize + 2 * 128 * 4
    # Per-sub-chunk temporaries: f32 cast of x, exp(x - row_max) input, the
    # hoisted column iota, plus ~4 (SUB,1) f32 row stats (conservatively
    # assumed lane-padded to 128).
    temp_per_row = 3 * lanes * 4 + 4 * 128 * 4
    return in_per_row, temp_per_row


def _plan_tiles(n, c, in_dtype):
    """Pick (block_rows, sub_rows) from an explicit VMEM working-set budget."""
    itemsize = jnp.dtype(in_dtype).itemsize
    sublane = 8 * max(1, 4 // itemsize)      # 8 (f32), 16 (bf16), 32 (int8)
    lanes = _round_up(c, 128)
    n_pad = _round_up(n, sublane)
    in_per_row, temp_per_row = _vmem_per_row(c, itemsize)

    # Inner sub-chunk: bounds the live range of the f32 temporaries while
    # keeping the fori_loop body big enough to hide the loop overhead.
    sub = min(_TEMP_VMEM_BUDGET // temp_per_row,
              max(1, _SUB_TARGET_ELEMS // lanes))
    sub = max(sublane, (sub // sublane) * sublane)
    sub = min(sub, n_pad)

    # Outer (DMA) block: as big as the double-buffered input budget allows
    # (no artificial row cap), but never bigger than the padded problem.
    tn = max(sub, (_INPUT_VMEM_BUDGET // in_per_row // sub) * sub)
    tn = min(tn, _round_up(n_pad, sub))
    return tn, sub


def _focal_loss_kernel(logits_ref, target_ref, out_ref, *,
                       n_total, block_rows, sub_rows):
    """Writes sum over this block's valid rows of -log softmax(x)[i, tgt[i]]."""
    blk = pl.program_id(0)
    c = logits_ref.shape[-1]
    n_sub = block_rows // sub_rows

    # Column-id tile, hoisted out of the inner loop (loop-invariant).
    col = jax.lax.broadcasted_iota(jnp.int32, (sub_rows, c), 1)

    def body(j, acc):
        r0 = pl.multiple_of(j * sub_rows, sub_rows)
        x = logits_ref[pl.ds(r0, sub_rows), :].astype(jnp.float32)   # (SUB, C)
        tgt = target_ref[pl.ds(r0, sub_rows), :]                      # (SUB, 1)

        # Gather the target logit straight from x (before the max
        # subtraction), so `x - row_max` has a single consumer (the exp).
        tgt_x = jnp.sum(jnp.where(col == tgt, x, 0.0),
                        axis=-1, keepdims=True)                       # (SUB, 1)

        row_max = jnp.max(x, axis=-1, keepdims=True)                  # (SUB, 1)
        lse = jnp.log(jnp.sum(jnp.exp(x - row_max),
                              axis=-1, keepdims=True))                # (SUB, 1)
        per_sample = row_max + lse - tgt_x                            # -log p_tgt

        # Mask rows past N (block / sub-chunk padding); garbage rows -> 0.
        row = (blk * block_rows + j * sub_rows
               + jax.lax.broadcasted_iota(jnp.int32, (sub_rows, 1), 0))
        per_sample = jnp.where(row < n_total, per_sample, 0.0)
        return acc + jnp.sum(per_sample, keepdims=True)               # (1, 1)

    total = jax.lax.fori_loop(0, n_sub, body, jnp.zeros((1, 1), jnp.float32))
    out_ref[...] = total.reshape(1, 1, 1)


def focal_loss(logits, target, gamma=0.0, block_rows=None, sub_rows=None):
    """logits: (N, C) float (bf16 welcome -- halves HBM traffic; math is f32
    in-kernel); target: (N,) integer class ids.  Returns scalar f32."""
    n, c = logits.shape
    itemsize = jnp.dtype(logits.dtype).itemsize
    target2d = target.astype(jnp.int32).reshape(n, 1)

    tn, sub = _plan_tiles(n, c, logits.dtype)
    if block_rows is not None:
        tn = int(block_rows)
        sub = min(sub, tn)
    if sub_rows is not None:
        sub = int(sub_rows)
    if tn % sub != 0:
        sub = tn                      # fall back: single inner pass

    num_blocks = pl.cdiv(n, tn)

    # Explicit scoped-VMEM request sized from the real working set
    # (double-buffered inputs + sub-chunk temporaries), capped for v7x.
    in_per_row, temp_per_row = _vmem_per_row(c, itemsize)
    working_set = tn * in_per_row + sub * temp_per_row
    vmem_limit = int(min(max(working_set * 5 // 4, 32 * 1024 * 1024),
                         _VMEM_LIMIT_CAP))

    kernel = functools.partial(_focal_loss_kernel, n_total=n,
                               block_rows=tn, sub_rows=sub)

    cost = pl.CostEstimate(
        flops=7 * n * c,                       # max/cmp/sel/sub/add-reduce etc.
        transcendentals=n * c + 2 * n,          # exp per element + per-row log
        bytes_accessed=n * c * itemsize + n * 4 + num_blocks * 4,
    )

    partials = pl.pallas_call(
        kernel,
        out_shape=jax.ShapeDtypeStruct((num_blocks, 1, 1), jnp.float32),
        grid_spec=pltpu.PrefetchScalarGridSpec(
            num_scalar_prefetch=0,
            grid=(num_blocks,),
            in_specs=[
                pl.BlockSpec((tn, c), lambda i: (i, 0)),   # logits row-block
                pl.BlockSpec((tn, 1), lambda i: (i, 0)),   # matching targets
            ],
            out_specs=pl.BlockSpec((1, 1, 1), lambda i: (i, 0, 0)),  # partial CE
        ),
        compiler_params=pltpu.CompilerParams(
            dimension_semantics=("parallel",),   # independent blocks -> both TCs on v7x
            vmem_limit_bytes=vmem_limit,
        ),
        cost_estimate=cost,
    )(logits, target2d)

    # Tiny epilogue in the wrapper: mean CE over N, then the focal transform
    # on the *mean* (matching the PyTorch module exactly).
    ce = jnp.sum(partials) / jnp.float32(n)
    p = jnp.exp(-ce)
    return (1.0 - p) ** jnp.float32(gamma) * ce


def _focal_loss_ref(logits, target, gamma=0.0):
    # Pure-JAX reference mirroring torch.nn.CrossEntropyLoss + focal transform.
    logp_rows = jax.nn.log_softmax(logits.astype(jnp.float32), axis=-1)
    per_sample = -jnp.take_along_axis(
        logp_rows, target.astype(jnp.int32)[:, None], axis=-1)[:, 0]
    ce = jnp.mean(per_sample)
    p = jnp.exp(-ce)
    return (1.0 - p) ** gamma * ce


if __name__ == "__main__":
    key = jax.random.PRNGKey(0)
    k1, k2, k3, k4 = jax.random.split(key, 4)

    # Small classification problem: batch=40, 32 classes.
    N, C = 40, 32
    logits_f32 = jax.random.normal(k1, (N, C), dtype=jnp.float32)
    target = jax.random.randint(k2, (N,), 0, C, dtype=jnp.int32)
    logits_bf16 = logits_f32.astype(jnp.bfloat16)

    for gamma in (0.0, 2.0):
        ref = _focal_loss_ref(logits_f32, target, gamma=gamma)

        # f32, auto-planned tiles (single full block here).
        out = jax.block_until_ready(focal_loss(logits_f32, target, gamma=gamma))
        assert jnp.allclose(out, ref, rtol=1e-5, atol=1e-5), (gamma, out, ref)

        # f32, forced multi-block grid with a ragged tail (exercises the
        # per-block partial outputs + inner fori_loop + tail-row masking).
        out = jax.block_until_ready(
            focal_loss(logits_f32, target, gamma=gamma, block_rows=16, sub_rows=8))
        assert jnp.allclose(out, ref, rtol=1e-5, atol=1e-5), (gamma, out, ref)

        # bf16 logits straight from HBM (half the traffic); f32 math in-kernel.
        ref_bf = _focal_loss_ref(logits_bf16, target, gamma=gamma)
        out = jax.block_until_ready(
            focal_loss(logits_bf16, target, gamma=gamma, block_rows=16, sub_rows=16))
        assert jnp.allclose(out, ref_bf, rtol=1e-4, atol=1e-4), (gamma, out, ref_bf)

    # Ragged N and non-multiple-of-128 C, auto plan (row padding + lane padding).
    N2, C2 = 100, 48
    logits2 = jax.random.normal(k3, (N2, C2), dtype=jnp.float32)
    target2 = jax.random.randint(k4, (N2,), 0, C2, dtype=jnp.int32)
    ref2 = _focal_loss_ref(logits2, target2, gamma=2.0)
    out2 = jax.block_until_ready(focal_loss(logits2, target2, gamma=2.0))
    assert jnp.allclose(out2, ref2, rtol=1e-5, atol=1e-5), (out2, ref2)

    print("KERNEL_OK")
</pallas_src>

<mosaic_0001>
module attributes {stable_mosaic.version = 11 : i64} {
  func.func @_focal_loss_kernel(%arg0: i32, %arg1: memref<40x32xf32, #tpu.memory_space<vmem>>, %arg2: memref<40x1xi32, #tpu.memory_space<vmem>>, %arg3: memref<1x1x1xf32, #tpu.memory_space<vmem>>) attributes {dimension_semantics = [#tpu.dimension_semantics<parallel>], iteration_bounds = array<i64: 1>, scalar_prefetch = 0 : i64, scratch_operands = 0 : i64, tpu.core_type = #tpu.core_type<tc>, window_params = [{transform_indices = @transform_0, window_bounds = array<i64: 40, 32>}, {transform_indices = @transform_1, window_bounds = array<i64: 40, 1>}, {transform_indices = @transform_2, window_bounds = array<i64: 1, 1, 1>}]} {
    %0 = tpu.iota {dimensions = array<i32: 1>} : vector<40x32xi32>
    %cst = arith.constant 0.000000e+00 : f32
    %1 = vector.broadcast %cst : f32 to vector<1x1xf32>
    %c0_i32 = arith.constant 0 : i32
    %c40_i32 = arith.constant 40 : i32
    %2 = arith.muli %c0_i32, %c40_i32 : i32
    %3 = tpu.assume_multiple %2, 40 : i32
    %4 = arith.index_cast %3 : i32 to index
    %c0 = arith.constant 0 : index
    %5 = vector.load %arg1[%4, %c0] : memref<40x32xf32, #tpu.memory_space<vmem>>, vector<40x32xf32>
    %6 = arith.index_cast %3 : i32 to index
    %c0_0 = arith.constant 0 : index
    %7 = vector.load %arg2[%6, %c0_0] : memref<40x1xi32, #tpu.memory_space<vmem>>, vector<40x1xi32>
    %8 = vector.broadcast %7 : vector<40x1xi32> to vector<40x32xi32>
    %9 = arith.cmpi eq, %0, %8 : vector<40x32xi32>
    %cst_1 = arith.constant 0.000000e+00 : f32
    %10 = vector.broadcast %cst_1 : f32 to vector<40x32xf32>
    %11 = arith.select %9, %5, %10 : vector<40x32xi1>, vector<40x32xf32>
    %cst_2 = arith.constant dense<0.000000e+00> : vector<40xf32>
    %12 = vector.multi_reduction <add>, %11, %cst_2 [1] : vector<40x32xf32> to vector<40xf32>
    %13 = vector.shape_cast %12 : vector<40xf32> to vector<40x1xf32>
    %cst_3 = arith.constant dense<0xFF800000> : vector<40xf32>
    %14 = vector.multi_reduction <maximumf>, %5, %cst_3 [1] : vector<40x32xf32> to vector<40xf32>
    %15 = vector.shape_cast %14 : vector<40xf32> to vector<40x1xf32>
    %16 = vector.broadcast %15 : vector<40x1xf32> to vector<40x32xf32>
    %17 = arith.subf %5, %16 : vector<40x32xf32>
    %18 = math.exp %17 : vector<40x32xf32>
    %cst_4 = arith.constant dense<0.000000e+00> : vector<40xf32>
    %19 = vector.multi_reduction <add>, %18, %cst_4 [1] : vector<40x32xf32> to vector<40xf32>
    %20 = vector.shape_cast %19 : vector<40xf32> to vector<40x1xf32>
    %21 = math.log %20 : vector<40x1xf32>
    %22 = arith.addf %15, %21 : vector<40x1xf32>
    %23 = arith.subf %22, %13 : vector<40x1xf32>
    %c40_i32_5 = arith.constant 40 : i32
    %24 = arith.muli %arg0, %c40_i32_5 : i32
    %c40_i32_6 = arith.constant 40 : i32
    %25 = arith.muli %c0_i32, %c40_i32_6 : i32
    %26 = arith.addi %24, %25 : i32
    %27 = tpu.iota {dimensions = array<i32: 0>} : vector<40x1xi32>
    %28 = vector.broadcast %26 : i32 to vector<40x1xi32>
    %29 = arith.addi %28, %27 : vector<40x1xi32>
    %c40_i32_7 = arith.constant 40 : i32
    %30 = vector.broadcast %c40_i32_7 : i32 to vector<40x1xi32>
    %31 = arith.cmpi slt, %29, %30 : vector<40x1xi32>
    %cst_8 = arith.constant 0.000000e+00 : f32
    %32 = vector.broadcast %cst_8 : f32 to vector<40x1xf32>
    %33 = arith.select %31, %23, %32 : vector<40x1xi1>, vector<40x1xf32>
    %34 = vector.shape_cast %33 : vector<40x1xf32> to vector<1x40x1xf32>
    %cst_9 = arith.constant dense<0.000000e+00> : vector<1xf32>
    %35 = vector.multi_reduction <add>, %34, %cst_9 [1, 2] : vector<1x40x1xf32> to vector<1xf32>
    %36 = vector.shape_cast %35 : vector<1xf32> to vector<1x1x1xf32>
    %37 = vector.extract %36[0, 0, 0] : f32 from vector<1x1x1xf32>
    %38 = vector.broadcast %37 : f32 to vector<1x1xf32>
    %39 = arith.addf %1, %38 : vector<1x1xf32>
    %c1_i32 = arith.constant 1 : i32
    %40 = vector.shape_cast %39 : vector<1x1xf32> to vector<1x1x1xf32>
    %c0_10 = arith.constant 0 : index
    %c0_11 = arith.constant 0 : index
    %c0_12 = arith.constant 0 : index
    %41 = vector.load %arg3[%c0_10, %c0_11, %c0_12] : memref<1x1x1xf32, #tpu.memory_space<vmem>>, vector<1x1x1xf32>
    tpu.vector_store %arg3[%c0_10, %c0_11, %c0_12], %40 {strides = array<i32>} : memref<1x1x1xf32, #tpu.memory_space<vmem>>, vector<1x1x1xf32>,
    return
  }
  func.func @transform_0(%arg0: i32) -> (i32, i32) {
    %c0_i32 = arith.constant 0 : i32
    %c0_i32_0 = arith.constant 0 : i32
    return %arg0, %c0_i32 : i32, i32
  }
  func.func @transform_1(%arg0: i32) -> (i32, i32) {
    %c0_i32 = arith.constant 0 : i32
    %c0_i32_0 = arith.constant 0 : i32
    return %arg0, %c0_i32 : i32, i32
  }
  func.func @transform_2(%arg0: i32) -> (i32, i32, i32) {
    %c0_i32 = arith.constant 0 : i32
    %c0_i32_0 = arith.constant 0 : i32
    %c0_i32_1 = arith.constant 0 : i32
    return %arg0, %c0_i32, %c0_i32_0 : i32, i32, i32
  }
}

</mosaic_0001>

<llo_original>
// kernel: tpu_custom_call.1
$region0: #{tpu_custom_call.1}
  #allocation0 [shape = 'u32[]', space=smem, size = 0x4, offset = 0x4, fixed_abs, tag = 'smem constant byte address 0x4 - core index']
  #allocation1 [shape = 'u32[144,128]{1,0:T(1,128)}', space=vmem, size = 0x12000, scoped, tag = 'internal scratch']
  %s0 = inlined_call_operand.vmem [shape: f32[40,32], index: 0, kind: input, shape index: {}]
  %s1 = inlined_call_operand.vmem [shape: s32[40,1], index: 1, kind: input, shape index: {}]
  %s2 = inlined_call_operand.hbm [shape: f32[1,1,1], index: 2, kind: output, shape index: {}]
  %s3 = sld [smem:[#allocation0]]
  $region18: #{tpu_custom_call.1} parent=0
    _
  %s5 = ssub.s32 1, %s3
  %s6 = scalar_select 0, %s5, %s3
  $region1: #{tpu_custom_call.1} parent=0
    #allocation2 [shape = 'u8[512]{0}', space=vmem, size = 0x400, scoped, tag = 'output window, operand 0, single buffered']
    #allocation3 [shape = 's32[1]{0}', space=sflag, size = 0x4, scoped, tag = 'scoped memory for tpu_custom_call.1']
    %7 = vsyncpa [#allocation3], 0
    // Predicated region
    $region2: #{tpu_custom_call.1} parent=1 // pred_check
      _
    $region3: #{tpu_custom_call.1} parent=1 // pred_check_branch
      %9 = sbr.rel (0) target = $region5
    $region4: #{tpu_custom_call.1} parent=1 // pred_region
      _
    $region5: #{tpu_custom_call.1} parent=1 // pred_fallthru
      _
    // Predicated region
    $region6: #{tpu_custom_call.1} parent=1 // pred_check
      _
    $region7: #{tpu_custom_call.1} parent=1 // pred_check_branch
      %11 = sbr.rel (0) target = $region9
    $region8: #{tpu_custom_call.1} parent=1 // pred_region
      _
    $region9: #{tpu_custom_call.1} parent=1 // pred_fallthru
      _
    %v12 = vlaneseq
    %v13 = vand.u32 %v12, 127
    %v14 = vld [vmem:[%s0] sm:$0xff]
    %v15 = vld [vmem:[%s0 + $0x8] sm:$0xff]
    %v16 = vld [vmem:[%s0 + $0x10] sm:$0xff]
    %v17 = vld [vmem:[%s0 + $0x18] sm:$0xff]
    %v18 = vld [vmem:[%s0 + $0x20] sm:$0xff]
    %v19 = vld [vmem:[%s1] sm:$0xff]
    %v20 = vld [vmem:[%s1 + $0x8] sm:$0xff]
    %v21 = vld [vmem:[%s1 + $0x10] sm:$0xff]
    %v22 = vld [vmem:[%s1 + $0x18] sm:$0xff]
    %v23 = vld [vmem:[%s1 + $0x20] sm:$0xff]
    %24 = vset.pattern.permute.xlu0 0
    %25 = vperm.xlu0 %24, %v19
    %v26 = vpop.permute.xlu0 %25
    %27 = vset.pattern.permute.xlu0 0
    %28 = vperm.xlu0 %27, %v20
    %v29 = vpop.permute.xlu0 %28
    %30 = vset.pattern.permute.xlu0 0
    %31 = vperm.xlu0 %30, %v21
    %v32 = vpop.permute.xlu0 %31
    %33 = vset.pattern.permute.xlu0 0
    %34 = vperm.xlu0 %33, %v22
    %v35 = vpop.permute.xlu0 %34
    %36 = vset.pattern.permute.xlu0 0
    %37 = vperm.xlu0 %36, %v23
    %v38 = vpop.permute.xlu0 %37
    %vm39 = vcmp.eq.s32.totalorder %v13, %v26
    %vm40 = vcmp.eq.s32.totalorder %v13, %v29
    %vm41 = vcmp.eq.s32.totalorder %v13, %v32
    %vm42 = vcmp.eq.s32.totalorder %v13, %v35
    %vm43 = vcmp.eq.s32.totalorder %v13, %v38
    %v44 = vsel %vm39, %v14, 0.0
    %v45 = vsel %vm40, %v15, 0.0
    %v46 = vsel %vm41, %v16, 0.0
    %v47 = vsel %vm42, %v17, 0.0
    %v48 = vsel %vm43, %v18, 0.0
    %vm49 = vcmask 261120
    %v50 = vsel %vm49, %v44, 0.0
    %51 = vadd.xlane.f32.xlu0 %v50
    %v52 = vpop.xlane.xlu0 %51
    %v53 = vsel %vm49, %v45, 0.0
    %54 = vadd.xlane.f32.xlu0 %v53
    %v55 = vpop.xlane.xlu0 %54
    %v56 = vsel %vm49, %v46, 0.0
    %57 = vadd.xlane.f32.xlu0 %v56
    %v58 = vpop.xlane.xlu0 %57
    %v59 = vsel %vm49, %v47, 0.0
    %60 = vadd.xlane.f32.xlu0 %v59
    %v61 = vpop.xlane.xlu0 %60
    %v62 = vsel %vm49, %v48, 0.0
    %63 = vadd.xlane.f32.xlu0 %v62
    %v64 = vpop.xlane.xlu0 %63
    %v65 = vsel %vm49, %v14, -inf
    %66 = vmax.xlane.f32.xlu0 %v65
    %v67 = vpop.xlane.xlu0 %66
    %v68 = vsel %vm49, %v15, -inf
    %69 = vmax.xlane.f32.xlu0 %v68
    %v70 = vpop.xlane.xlu0 %69
    %v71 = vsel %vm49, %v16, -inf
    %72 = vmax.xlane.f32.xlu0 %v71
    %v73 = vpop.xlane.xlu0 %72
    %v74 = vsel %vm49, %v17, -inf
    %75 = vmax.xlane.f32.xlu0 %v74
    %v76 = vpop.xlane.xlu0 %75
    %v77 = vsel %vm49, %v18, -inf
    %78 = vmax.xlane.f32.xlu0 %v77
    %v79 = vpop.xlane.xlu0 %78
    %v80 = vsub.f32 %v14, %v67
    %v81 = vsub.f32 %v15, %v70
    %v82 = vsub.f32 %v16, %v73
    %v83 = vsub.f32 %v17, %v76
    %v84 = vsub.f32 %v18, %v79
    %v85 = vmul.f32 %v80, 1.442695
    %v86 = vpow.pop %v85
    %v87 = vmul.f32 %v81, 1.442695
    %v88 = vpow.pop %v87
    %v89 = vmul.f32 %v82, 1.442695
    %v90 = vpow.pop %v89
    %v91 = vmul.f32 %v83, 1.442695
    %v92 = vpow.pop %v91
    %v93 = vmul.f32 %v84, 1.442695
    %v94 = vpow.pop %v93
    %v95 = vsel %vm49, %v86, 0.0
    %96 = vadd.xlane.f32.xlu0 %v95
    %v97 = vpop.xlane.xlu0 %96
    %v98 = vsel %vm49, %v88, 0.0
    %99 = vadd.xlane.f32.xlu0 %v98
    %v100 = vpop.xlane.xlu0 %99
    %v101 = vsel %vm49, %v90, 0.0
    %102 = vadd.xlane.f32.xlu0 %v101
    %v103 = vpop.xlane.xlu0 %102
    %v104 = vsel %vm49, %v92, 0.0
    %105 = vadd.xlane.f32.xlu0 %v104
    %v106 = vpop.xlane.xlu0 %105
    %v107 = vsel %vm49, %v94, 0.0
    %108 = vadd.xlane.f32.xlu0 %v107
    %v109 = vpop.xlane.xlu0 %108
    %v110 = vlog2.pop %v97
    %v111 = vmul.f32 %v110, 0.6931472
    %v112 = vlog2.pop %v100
    %v113 = vmul.f32 %v112, 0.6931472
    %v114 = vlog2.pop %v103
    %v115 = vmul.f32 %v114, 0.6931472
    %v116 = vlog2.pop %v106
    %v117 = vmul.f32 %v116, 0.6931472
    %v118 = vlog2.pop %v109
    %v119 = vmul.f32 %v118, 0.6931472
    %v120 = vadd.f32 %v67, %v111
    %v121 = vadd.f32 %v70, %v113
    %v122 = vadd.f32 %v73, %v115
    %v123 = vadd.f32 %v76, %v117
    %v124 = vadd.f32 %v79, %v119
    %v125 = vsub.f32 %v120, %v52
    %v126 = vsub.f32 %v121, %v55
    %v127 = vsub.f32 %v122, %v58
    %v128 = vsub.f32 %v123, %v61
    %v129 = vsub.f32 %v124, %v64
    %s130 = smul.u32 0, 40
    %v131 = vlaneseq
    %v132 = vshrl.u32 %v131, 7
    %v133 = vadd.s32 %v132, 8
    %v134 = vadd.s32 %v132, 16
    %v135 = vadd.s32 %v132, 24
    %v136 = vadd.s32 %v132, 32
    %v137 = vstv %s130
    %v138 = vadd.s32 %v137, %v132
    %v139 = vadd.s32 %v137, %v133
    %v140 = vadd.s32 %v137, %v134
    %v141 = vadd.s32 %v137, %v135
    %v142 = vadd.s32 %v137, %v136
    %vm143 = vcmp.lt.s32.totalorder %v138, 40
    %vm144 = vcmp.lt.s32.totalorder %v139, 40
    %vm145 = vcmp.lt.s32.totalorder %v140, 40
    %vm146 = vcmp.lt.s32.totalorder %v141, 40
    %vm147 = vcmp.lt.s32.totalorder %v142, 40
    %v148 = vsel %vm143, %v125, 0.0
    %v149 = vsel %vm144, %v126, 0.0
    %v150 = vsel %vm145, %v127, 0.0
    %v151 = vsel %vm146, %v128, 0.0
    %v152 = vsel %vm147, %v129, 0.0
    %vm153 = vcmask 7168
    %v154 = vsel %vm153, %v148, 0.0
    %v155 = vsel %vm153, %v149, 0.0
    %v156 = vadd.f32 %v154, %v155
    %v157 = vsel %vm153, %v150, 0.0
    %v158 = vadd.f32 %v156, %v157
    %v159 = vsel %vm153, %v151, 0.0
    %v160 = vadd.f32 %v158, %v159
    %v161 = vsel %vm153, %v152, 0.0
    %v162 = vadd.f32 %v160, %v161
    %163 = vadd.xlane.f32.xlu0 %v162
    %v164 = vpop.xlane.xlu0 %163
    %v165 = vrot.slane %v164, 4
    %v166 = vadd.f32 %v164, %v165
    %v167 = vrot.slane %v166, 2
    %v168 = vadd.f32 %v166, %v167
    %v169 = vrot.slane %v168, 1
    %v170 = vadd.f32 %v168, %v169
    %s171 = vtos %v170
    %v172 = vstv %s171
    %v173 = vadd.f32 %v172, 0.0
    %vm174 = vcmask 0
    %175 = vst.msk [vmem:[#allocation2] sm:$0x1] %vm174, %v173
    // Predicated region
    $region10: #{tpu_custom_call.1} parent=1 // pred_check
      _
    $region11: #{tpu_custom_call.1} parent=1 // pred_check_branch
      %177 = sbr.rel (0) target = $region13
    $region12: #{tpu_custom_call.1} parent=1 // pred_region
      %s179 = ssub.s32 16, 16
      %180 = vsyncadd [#allocation3], %s179
      %s182 = sshll.u32 [#allocation2], 4
      %s183 = int_to_ptr.vmem [resolvable:$true] %s182
      %185 = dma.vmem_to_hbm [thread:$0]  %s183, 16, %s2, [#allocation3]
    $region13: #{tpu_custom_call.1} parent=1 // pred_fallthru
      _
    // Predicated region
    $region14: #{tpu_custom_call.1} parent=1 // pred_check
      _
    $region15: #{tpu_custom_call.1} parent=1 // pred_check_branch
      %187 = sbr.rel (0) target = $region17
    $region16: #{tpu_custom_call.1} parent=1 // pred_region
      %188 = dma.done [#allocation3], 16
    $region17: #{tpu_custom_call.1} parent=1 // pred_fallthru
      _
    %189 = vsyncpa [#allocation3], 1

</llo_original>
